<compile_context>
chip_gen: v7x
topology: tpu7x:2x2x1
jax: 0.10.0
libtpu: 0.0.40
codegen_flags: <defaults>
</compile_context>

<pallas_src>
import math

import jax
import jax.numpy as jnp
from jax.experimental import pallas as pl
from jax.experimental.pallas import tpu as pltpu


# ----------------------------------------------------------------------------------
# Parameter packing — run ONCE at parameter-prep time (feedback #1).
# ----------------------------------------------------------------------------------
def pack_lstm_params(w_ih, w_hh, b_ih, b_hh):
    """w_*: (4, I, H) gate order (in, forget, cell, out); b_*: (4, H).

    Returns  w_x: (I, 4H)   w_h: (I, 4H)   b: (1, 4H)  (b_ih + b_hh pre-summed)."""
    I, H = w_ih.shape[1], w_ih.shape[2]
    w_x = jnp.transpose(w_ih, (1, 0, 2)).reshape(I, 4 * H)
    w_h = jnp.transpose(w_hh, (1, 0, 2)).reshape(I, 4 * H)
    b = (b_ih + b_hh).reshape(1, 4 * H)
    return w_x, w_h, b


# ----------------------------------------------------------------------------------
# Single-step kernel — matches the module's forward exactly.
# ----------------------------------------------------------------------------------
def lstm_cell_kernel(x_ref, h_ref, wx_ref, wh_ref, b_ref, c_ref, h_out_ref, c_out_ref):
    H = c_ref.shape[-1]

    # Two lane-dense MXU pushes + one fused bias add -> (B, 4H) pre-activation slab.
    z = (jnp.dot(x_ref[...], wx_ref[...], preferred_element_type=jnp.float32)
         + jnp.dot(h_ref[...], wh_ref[...], preferred_element_type=jnp.float32)
         + b_ref[...])

    ingate     = jax.nn.sigmoid(z[:, 0 * H:1 * H])
    forgetgate = jax.nn.sigmoid(z[:, 1 * H:2 * H])
    cellgate   = jnp.tanh(z[:, 2 * H:3 * H])
    outgate    = jax.nn.sigmoid(z[:, 3 * H:4 * H])

    c_new = forgetgate * c_ref[...] + ingate * cellgate
    h_new = outgate * jnp.tanh(c_new)

    h_out_ref[...] = h_new
    c_out_ref[...] = c_new


@jax.jit
def lstm_cell(x, h, c, w_x, w_h, b):
    """Single LSTM step.  x:(B,I) h:(B,I) c:(B,H) + packed params -> (h_new, c_new)."""
    B, I = x.shape
    H = c.shape[-1]
    vmem = pl.BlockSpec(memory_space=pltpu.MemorySpace.VMEM)

    flops = 2 * 2 * B * I * (4 * H) + 10 * B * H
    transcendentals = 5 * B * H
    bytes_accessed = 4 * (x.size + h.size + w_x.size + w_h.size + b.size
                          + c.size + 2 * B * H)

    h_new, c_new = pl.pallas_call(
        lstm_cell_kernel,
        out_shape=(jax.ShapeDtypeStruct((B, H), jnp.float32),
                   jax.ShapeDtypeStruct((B, H), jnp.float32)),
        in_specs=[vmem, vmem, vmem, vmem, vmem, vmem],
        out_specs=(vmem, vmem),
        cost_estimate=pl.CostEstimate(
            flops=flops,
            transcendentals=transcendentals,
            bytes_accessed=bytes_accessed),
    )(x, h, w_x, w_h, b, c)
    return h_new, c_new


# ----------------------------------------------------------------------------------
# Sequence version: timestep loop inside the kernel (feedback #2, #4).
# ----------------------------------------------------------------------------------
def xproj_kernel(x_ref, w_ref, b_ref, o_ref):
    # One big (T*B, I) x (I, 4H) matmul for the non-recurrent input contribution + bias.
    o_ref[...] = (jnp.dot(x_ref[...], w_ref[...], preferred_element_type=jnp.float32)
                  + b_ref[...])


def lstm_seq_kernel(xz_ref, wh_ref, h0_ref, c0_ref, hseq_ref, cfin_ref, h_sc, c_sc):
    t = pl.program_id(0)

    @pl.when(t == 0)
    def _():
        h_sc[...] = h0_ref[...]
        c_sc[...] = c0_ref[...]

    H = c_sc.shape[-1]
    # Only the recurrent half is computed per step; x@W_ih + b was pre-batched.
    z = xz_ref[0] + jnp.dot(h_sc[...], wh_ref[...], preferred_element_type=jnp.float32)

    ingate     = jax.nn.sigmoid(z[:, 0 * H:1 * H])
    forgetgate = jax.nn.sigmoid(z[:, 1 * H:2 * H])
    cellgate   = jnp.tanh(z[:, 2 * H:3 * H])
    outgate    = jax.nn.sigmoid(z[:, 3 * H:4 * H])

    c_new = forgetgate * c_sc[...] + ingate * cellgate
    h_new = outgate * jnp.tanh(c_new)

    h_sc[...] = h_new
    c_sc[...] = c_new
    hseq_ref[0] = h_new
    cfin_ref[...] = c_new  # constant-index output block: final writeback keeps last value


@jax.jit
def lstm_sequence(xs, h0, c0, w_x, w_h, b):
    """Run the cell over a sequence.  xs:(T,B,I) h0,c0:(B,H); requires I == H."""
    T, B, I = xs.shape
    H = c0.shape[-1]
    assert I == H, "recurrent iteration of this module requires input_size == hidden_size"
    vmem = pl.BlockSpec(memory_space=pltpu.MemorySpace.VMEM)

    # Non-recurrent half, batched over time: one MXU-shaped matmul instead of T tiny ones.
    xz = pl.pallas_call(
        xproj_kernel,
        out_shape=jax.ShapeDtypeStruct((T * B, 4 * H), jnp.float32),
        in_specs=[vmem, vmem, vmem],
        out_specs=vmem,
    )(xs.reshape(T * B, I), w_x, b)
    xz = xz.reshape(T, B, 4 * H)

    h_seq, c_fin = pl.pallas_call(
        lstm_seq_kernel,
        out_shape=(jax.ShapeDtypeStruct((T, B, H), jnp.float32),
                   jax.ShapeDtypeStruct((B, H), jnp.float32)),
        grid_spec=pltpu.PrefetchScalarGridSpec(
            num_scalar_prefetch=0,
            grid=(T,),
            in_specs=[
                pl.BlockSpec((1, B, 4 * H), lambda t: (t, 0, 0)),  # streamed x-proj block
                pl.BlockSpec((I, 4 * H), lambda t: (0, 0)),        # recurrent W, VMEM-resident
                pl.BlockSpec((B, H), lambda t: (0, 0)),            # h0 (read at t == 0)
                pl.BlockSpec((B, H), lambda t: (0, 0)),            # c0 (read at t == 0)
            ],
            out_specs=(
                pl.BlockSpec((1, B, H), lambda t: (t, 0, 0)),      # per-step h
                pl.BlockSpec((B, H), lambda t: (0, 0)),            # final c
            ),
            scratch_shapes=[pltpu.VMEM((B, H), jnp.float32),       # carried h
                            pltpu.VMEM((B, H), jnp.float32)],      # carried c
        ),
        compiler_params=pltpu.CompilerParams(
            dimension_semantics=("arbitrary",)),
    )(xz, w_h, h0, c0)
    return h_seq, c_fin


# ----------------------------------------------------------------------------------
# Pure-JAX reference mirroring the PyTorch forward exactly.
# ----------------------------------------------------------------------------------
def lstm_cell_ref(x, h, c, w_ih, w_hh, b_ih, b_hh):
    ih = jnp.einsum('bi,gih->gbh', x, w_ih)
    hh = jnp.einsum('bi,gih->gbh', h, w_hh)
    ih0 = ih[0] + b_ih[0]; hh0 = hh[0] + b_hh[0]
    ih1 = ih[1] + b_ih[1]; hh1 = hh[1] + b_hh[1]
    ih2 = ih[2] + b_ih[2]; hh2 = hh[2] + b_hh[2]
    ih3 = ih[3] + b_ih[3]; hh3 = hh[3] + b_hh[3]
    ingate = jax.nn.sigmoid(ih0 + hh0)
    forgetgate = jax.nn.sigmoid(ih1 + hh1)
    cellgate = jnp.tanh(ih2 + hh2)
    outgate = jax.nn.sigmoid(ih3 + hh3)
    c_new = forgetgate * c + ingate * cellgate
    h_new = outgate * jnp.tanh(c_new)
    return h_new, c_new


def xavier_uniform(key, shape):
    # torch.nn.init.xavier_uniform_ for a (4, I, H) tensor: fan_in = I*H, fan_out = 4*H
    fan_in = shape[1] * shape[2]
    fan_out = shape[0] * shape[2]
    bound = math.sqrt(6.0 / (fan_in + fan_out))
    return jax.random.uniform(key, shape, jnp.float32, -bound, bound)


if __name__ == "__main__":
    key = jax.random.PRNGKey(0)
    k = jax.random.split(key, 12)

    # ---------------- single step (module spec shapes: H=32, I=16, B=8) ----------------
    hidden_size, input_size, B = 32, 16, 8

    w_ih = xavier_uniform(k[0], (4, input_size, hidden_size))
    w_hh = xavier_uniform(k[1], (4, input_size, hidden_size))
    b_ih = jax.random.normal(k[2], (4, hidden_size), jnp.float32)
    b_hh = jax.random.normal(k[3], (4, hidden_size), jnp.float32)

    x = jax.random.normal(k[4], (B, input_size), jnp.float32)
    h = jax.random.normal(k[5], (B, input_size), jnp.float32)
    c = jax.random.normal(k[6], (B, hidden_size), jnp.float32)

    # Packing runs once, outside the per-step call.
    w_x, w_h, b = pack_lstm_params(w_ih, w_hh, b_ih, b_hh)

    h_out, c_out = jax.block_until_ready(lstm_cell(x, h, c, w_x, w_h, b))
    h_ref, c_ref = lstm_cell_ref(x, h, c, w_ih, w_hh, b_ih, b_hh)

    assert h_out.shape == (B, hidden_size) and c_out.shape == (B, hidden_size)
    assert jnp.allclose(h_out, h_ref, atol=1e-5, rtol=1e-5)
    assert jnp.allclose(c_out, c_ref, atol=1e-5, rtol=1e-5)

    # ------------- in-kernel timestep loop (requires I == H; use 32) -------------------
    T, H2 = 8, 32
    w_ih2 = xavier_uniform(k[7], (4, H2, H2))
    w_hh2 = xavier_uniform(k[8], (4, H2, H2))
    b_ih2 = jax.random.normal(k[9], (4, H2), jnp.float32)
    b_hh2 = jax.random.normal(k[10], (4, H2), jnp.float32)
    xs = jax.random.normal(k[11], (T, B, H2), jnp.float32)
    h0 = jnp.zeros((B, H2), jnp.float32)
    c0 = jnp.zeros((B, H2), jnp.float32)

    wx2, wh2, b2 = pack_lstm_params(w_ih2, w_hh2, b_ih2, b_hh2)
    h_seq, c_fin = jax.block_until_ready(lstm_sequence(xs, h0, c0, wx2, wh2, b2))

    h_r, c_r = h0, c0
    hs_ref = []
    for t in range(T):
        h_r, c_r = lstm_cell_ref(xs[t], h_r, c_r, w_ih2, w_hh2, b_ih2, b_hh2)
        hs_ref.append(h_r)
    hs_ref = jnp.stack(hs_ref)

    assert h_seq.shape == (T, B, H2) and c_fin.shape == (B, H2)
    assert jnp.allclose(h_seq, hs_ref, atol=1e-4, rtol=1e-4)
    assert jnp.allclose(c_fin, c_r, atol=1e-4, rtol=1e-4)

    print("KERNEL_OK")
</pallas_src>

<mosaic_0001>
module attributes {stable_mosaic.version = 11 : i64} {
  func.func @lstm_cell_kernel(%arg0: memref<8x16xf32, #tpu.memory_space<vmem>>, %arg1: memref<8x16xf32, #tpu.memory_space<vmem>>, %arg2: memref<16x128xf32, #tpu.memory_space<vmem>>, %arg3: memref<16x128xf32, #tpu.memory_space<vmem>>, %arg4: memref<1x128xf32, #tpu.memory_space<vmem>>, %arg5: memref<8x32xf32, #tpu.memory_space<vmem>>, %arg6: memref<8x32xf32, #tpu.memory_space<vmem>>, %arg7: memref<8x32xf32, #tpu.memory_space<vmem>>) attributes {dimension_semantics = [], scalar_prefetch = 0 : i64, scratch_operands = 0 : i64, tpu.core_type = #tpu.core_type<tc>} {
    %c0 = arith.constant 0 : index
    %c0_0 = arith.constant 0 : index
    %0 = vector.load %arg0[%c0, %c0_0] : memref<8x16xf32, #tpu.memory_space<vmem>>, vector<8x16xf32>
    %c0_1 = arith.constant 0 : index
    %c0_2 = arith.constant 0 : index
    %1 = vector.load %arg2[%c0_1, %c0_2] : memref<16x128xf32, #tpu.memory_space<vmem>>, vector<16x128xf32>
    %cst = arith.constant dense<0.000000e+00> : vector<8x128xf32>
    %2 = tpu.matmul %0, %1, %cst {dimension_numbers = #tpu.dot_dimension_numbers<[1], [0], [0], [1], [0, 0, 1, 1], [], []>} : vector<8x16xf32>, vector<16x128xf32>, vector<8x128xf32> -> vector<8x128xf32>
    %c0_3 = arith.constant 0 : index
    %c0_4 = arith.constant 0 : index
    %3 = vector.load %arg1[%c0_3, %c0_4] : memref<8x16xf32, #tpu.memory_space<vmem>>, vector<8x16xf32>
    %c0_5 = arith.constant 0 : index
    %c0_6 = arith.constant 0 : index
    %4 = vector.load %arg3[%c0_5, %c0_6] : memref<16x128xf32, #tpu.memory_space<vmem>>, vector<16x128xf32>
    %cst_7 = arith.constant dense<0.000000e+00> : vector<8x128xf32>
    %5 = tpu.matmul %3, %4, %cst_7 {dimension_numbers = #tpu.dot_dimension_numbers<[1], [0], [0], [1], [0, 0, 1, 1], [], []>} : vector<8x16xf32>, vector<16x128xf32>, vector<8x128xf32> -> vector<8x128xf32>
    %6 = arith.addf %2, %5 : vector<8x128xf32>
    %c0_8 = arith.constant 0 : index
    %c0_9 = arith.constant 0 : index
    %7 = vector.load %arg4[%c0_8, %c0_9] : memref<1x128xf32, #tpu.memory_space<vmem>>, vector<1x128xf32>
    %8 = vector.broadcast %7 : vector<1x128xf32> to vector<8x128xf32>
    %9 = arith.addf %6, %8 : vector<8x128xf32>
    %10 = vector.extract_strided_slice %9 {offsets = [0, 0], sizes = [8, 32], strides = [1, 1]} : vector<8x128xf32> to vector<8x32xf32>
    %11 = arith.negf %10 : vector<8x32xf32>
    %12 = math.exp %11 : vector<8x32xf32>
    %cst_10 = arith.constant 1.000000e+00 : f32
    %13 = vector.broadcast %cst_10 : f32 to vector<8x32xf32>
    %14 = arith.addf %13, %12 : vector<8x32xf32>
    %15 = arith.divf %13, %14 : vector<8x32xf32>
    %16 = vector.extract_strided_slice %9 {offsets = [0, 32], sizes = [8, 32], strides = [1, 1]} : vector<8x128xf32> to vector<8x32xf32>
    %17 = arith.negf %16 : vector<8x32xf32>
    %18 = math.exp %17 : vector<8x32xf32>
    %cst_11 = arith.constant 1.000000e+00 : f32
    %19 = vector.broadcast %cst_11 : f32 to vector<8x32xf32>
    %20 = arith.addf %19, %18 : vector<8x32xf32>
    %21 = arith.divf %19, %20 : vector<8x32xf32>
    %22 = vector.extract_strided_slice %9 {offsets = [0, 64], sizes = [8, 32], strides = [1, 1]} : vector<8x128xf32> to vector<8x32xf32>
    %23 = math.tanh %22 : vector<8x32xf32>
    %24 = vector.extract_strided_slice %9 {offsets = [0, 96], sizes = [8, 32], strides = [1, 1]} : vector<8x128xf32> to vector<8x32xf32>
    %25 = arith.negf %24 : vector<8x32xf32>
    %26 = math.exp %25 : vector<8x32xf32>
    %cst_12 = arith.constant 1.000000e+00 : f32
    %27 = vector.broadcast %cst_12 : f32 to vector<8x32xf32>
    %28 = arith.addf %27, %26 : vector<8x32xf32>
    %29 = arith.divf %27, %28 : vector<8x32xf32>
    %c0_13 = arith.constant 0 : index
    %c0_14 = arith.constant 0 : index
    %30 = vector.load %arg5[%c0_13, %c0_14] : memref<8x32xf32, #tpu.memory_space<vmem>>, vector<8x32xf32>
    %31 = arith.mulf %21, %30 : vector<8x32xf32>
    %32 = arith.mulf %15, %23 : vector<8x32xf32>
    %33 = arith.addf %31, %32 : vector<8x32xf32>
    %34 = math.tanh %33 : vector<8x32xf32>
    %35 = arith.mulf %29, %34 : vector<8x32xf32>
    %c0_15 = arith.constant 0 : index
    %c0_16 = arith.constant 0 : index
    %36 = vector.load %arg6[%c0_15, %c0_16] : memref<8x32xf32, #tpu.memory_space<vmem>>, vector<8x32xf32>
    tpu.vector_store %arg6[%c0_15, %c0_16], %35 {strides = array<i32>} : memref<8x32xf32, #tpu.memory_space<vmem>>, vector<8x32xf32>,
    %c0_17 = arith.constant 0 : index
    %c0_18 = arith.constant 0 : index
    %37 = vector.load %arg7[%c0_17, %c0_18] : memref<8x32xf32, #tpu.memory_space<vmem>>, vector<8x32xf32>
    tpu.vector_store %arg7[%c0_17, %c0_18], %33 {strides = array<i32>} : memref<8x32xf32, #tpu.memory_space<vmem>>, vector<8x32xf32>,
    return
  }
}

</mosaic_0001>

<llo_original>
// kernel: lstm_cell.1
$region0: #{lstm_cell.1}
  #allocation0 [shape = 'u32[]', space=smem, size = 0x4, offset = 0x4, fixed_abs, tag = 'smem constant byte address 0x4 - core index']
  #allocation1 [shape = 'u32[144,128]{1,0:T(1,128)}', space=vmem, size = 0x12000, scoped, tag = 'internal scratch']
  %s0 = inlined_call_operand.hbm [shape: f32[8,16], index: 0, kind: input, shape index: {}]
  %s1 = inlined_call_operand.hbm [shape: f32[8,16], index: 1, kind: input, shape index: {}]
  %s2 = inlined_call_operand.hbm [shape: f32[16,128], index: 2, kind: input, shape index: {}]
  %s3 = inlined_call_operand.hbm [shape: f32[16,128], index: 3, kind: input, shape index: {}]
  %s4 = inlined_call_operand.vmem [shape: f32[1,128], index: 4, kind: input, shape index: {}]
  %s5 = inlined_call_operand.hbm [shape: f32[8,32], index: 5, kind: input, shape index: {}]
  %s6 = inlined_call_operand.hbm [shape: f32[8,32], index: 6, kind: output, shape index: {0}]
  %s7 = inlined_call_operand.hbm [shape: f32[8,32], index: 7, kind: output, shape index: {1}]
  %8 = xla_tuple %s6, %s7
  %s9 = sld [smem:[#allocation0]]
  $region62: #{lstm_cell.1} parent=0
    _
  %s11 = ssub.s32 1, %s9
  %s12 = scalar_select 0, %s11, %s9
  $region1: #{lstm_cell.1} parent=0
    #allocation2 [shape = 'u8[4096]{0}', space=vmem, size = 0x1000, scoped, tag = 'input window, operand 0, single buffered']
    #allocation3 [shape = 's32[1]{0}', space=sflag, size = 0x4, scoped, tag = 'scoped memory for lstm_cell.1']
    #allocation4 [shape = 's32[1]{0}', space=sflag, size = 0x4, scoped, tag = 'scoped memory for lstm_cell.1']
    #allocation5 [shape = 'u8[4096]{0}', space=vmem, size = 0x1000, scoped, tag = 'input window, operand 1, single buffered']
    #allocation6 [shape = 's32[1]{0}', space=sflag, size = 0x4, scoped, tag = 'scoped memory for lstm_cell.1']
    #allocation7 [shape = 'u8[8192]{0}', space=vmem, size = 0x2000, scoped, tag = 'input window, operand 2, single buffered']
    #allocation8 [shape = 'u8[8192]{0}', space=vmem, size = 0x2000, scoped, tag = 'input window, operand 3, single buffered']
    #allocation9 [shape = 's32[1]{0}', space=sflag, size = 0x4, scoped, tag = 'scoped memory for lstm_cell.1']
    #allocation10 [shape = 'u8[4096]{0}', space=vmem, size = 0x1000, scoped, tag = 'input window, operand 5, single buffered']
    #allocation11 [shape = 'u8[4096]{0}', space=vmem, size = 0x1000, scoped, tag = 'output window, operand 0, single buffered']
    #allocation12 [shape = 'u8[4096]{0}', space=vmem, size = 0x1000, scoped, tag = 'output window, operand 1, single buffered']
    #allocation13 [shape = 's32[1]{0}', space=sflag, size = 0x4, scoped, tag = 'scoped memory for lstm_cell.1']
    %13 = vsyncpa [#allocation3], 0
    %14 = vsyncpa [#allocation6], 0
    %15 = vsyncpa [#allocation9], 0
    %16 = vsyncpa [#allocation4], 0
    %17 = vsyncpa [#allocation13], 0
    // Predicated region
    $region2: #{lstm_cell.1} parent=1 // pred_check
      _
    $region3: #{lstm_cell.1} parent=1 // pred_check_branch
      %19 = sbr.rel (0) target = $region5
    $region4: #{lstm_cell.1} parent=1 // pred_region
      %s21 = ssub.s32 128, 128
      %22 = vsyncadd [#allocation3], %s21
      %s24 = sshll.u32 [#allocation2], 4
      %s25 = int_to_ptr.vmem [resolvable:$true] %s24
      %27 = dma.hbm_to_vmem [thread:$0]  %s0, 128, %s25, [#allocation3]
    $region5: #{lstm_cell.1} parent=1 // pred_fallthru
      _
    // Predicated region
    $region6: #{lstm_cell.1} parent=1 // pred_check
      _
    $region7: #{lstm_cell.1} parent=1 // pred_check_branch
      %29 = sbr.rel (0) target = $region9
    $region8: #{lstm_cell.1} parent=1 // pred_region
      %s31 = ssub.s32 128, 128
      %32 = vsyncadd [#allocation6], %s31
      %s34 = sshll.u32 [#allocation5], 4
      %s35 = int_to_ptr.vmem [resolvable:$true] %s34
      %37 = dma.hbm_to_vmem [thread:$0]  %s1, 128, %s35, [#allocation6]
    $region9: #{lstm_cell.1} parent=1 // pred_fallthru
      _
    // Predicated region
    $region10: #{lstm_cell.1} parent=1 // pred_check
      _
    $region11: #{lstm_cell.1} parent=1 // pred_check_branch
      %39 = sbr.rel (0) target = $region13
    $region12: #{lstm_cell.1} parent=1 // pred_region
      %s41 = ssub.s32 256, 256
      %42 = vsyncadd [#allocation6], %s41
      %s43 = sshll.u32 [#allocation7], 4
      %s44 = int_to_ptr.vmem [resolvable:$true] %s43
      %49 = dma.hbm_to_vmem [thread:$0]  %s2, 256, %s44, [#allocation6], 128, 128, 8
    $region13: #{lstm_cell.1} parent=1 // pred_fallthru
      _
    // Predicated region
    $region14: #{lstm_cell.1} parent=1 // pred_check
      _
    $region15: #{lstm_cell.1} parent=1 // pred_check_branch
      %51 = sbr.rel (0) target = $region17
    $region16: #{lstm_cell.1} parent=1 // pred_region
      %s53 = ssub.s32 256, 256
      %54 = vsyncadd [#allocation9], %s53
      %s55 = sshll.u32 [#allocation8], 4
      %s56 = int_to_ptr.vmem [resolvable:$true] %s55
      %61 = dma.hbm_to_vmem [thread:$0]  %s3, 256, %s56, [#allocation9], 128, 128, 8
    $region17: #{lstm_cell.1} parent=1 // pred_fallthru
      _
    // Predicated region
    $region18: #{lstm_cell.1} parent=1 // pred_check
      _
    $region19: #{lstm_cell.1} parent=1 // pred_check_branch
      %63 = sbr.rel (0) target = $region21
    $region20: #{lstm_cell.1} parent=1 // pred_region
      _
    $region21: #{lstm_cell.1} parent=1 // pred_fallthru
      _
    // Predicated region
    $region22: #{lstm_cell.1} parent=1 // pred_check
      _
    $region23: #{lstm_cell.1} parent=1 // pred_check_branch
      %65 = sbr.rel (0) target = $region25
    $region24: #{lstm_cell.1} parent=1 // pred_region
      %s67 = ssub.s32 128, 128
      %68 = vsyncadd [#allocation9], %s67
      %s70 = sshll.u32 [#allocation10], 4
      %s71 = int_to_ptr.vmem [resolvable:$true] %s70
      %73 = dma.hbm_to_vmem [thread:$0]  %s5, 128, %s71, [#allocation9]
    $region25: #{lstm_cell.1} parent=1 // pred_fallthru
      _
    // Predicated region
    $region26: #{lstm_cell.1} parent=1 // pred_check
      _
    $region27: #{lstm_cell.1} parent=1 // pred_check_branch
      %75 = sbr.rel (0) target = $region29
    $region28: #{lstm_cell.1} parent=1 // pred_region
      %76 = dma.done [#allocation3], 128
    $region29: #{lstm_cell.1} parent=1 // pred_fallthru
      _
    // Predicated region
    $region30: #{lstm_cell.1} parent=1 // pred_check
      _
    $region31: #{lstm_cell.1} parent=1 // pred_check_branch
      %78 = sbr.rel (0) target = $region33
    $region32: #{lstm_cell.1} parent=1 // pred_region
      %79 = dma.done [#allocation6], 128
    $region33: #{lstm_cell.1} parent=1 // pred_fallthru
      _
    // Predicated region
    $region34: #{lstm_cell.1} parent=1 // pred_check
      _
    $region35: #{lstm_cell.1} parent=1 // pred_check_branch
      %81 = sbr.rel (0) target = $region37
    $region36: #{lstm_cell.1} parent=1 // pred_region
      %82 = dma.done [#allocation6], 256
    $region37: #{lstm_cell.1} parent=1 // pred_fallthru
      _
    // Predicated region
    $region38: #{lstm_cell.1} parent=1 // pred_check
      _
    $region39: #{lstm_cell.1} parent=1 // pred_check_branch
      %84 = sbr.rel (0) target = $region41
    $region40: #{lstm_cell.1} parent=1 // pred_region
      %85 = dma.done [#allocation9], 256
    $region41: #{lstm_cell.1} parent=1 // pred_fallthru
      _
    // Predicated region
    $region42: #{lstm_cell.1} parent=1 // pred_check
      _
    $region43: #{lstm_cell.1} parent=1 // pred_check_branch
      %87 = sbr.rel (0) target = $region45
    $region44: #{lstm_cell.1} parent=1 // pred_region
      %88 = dma.done [#allocation9], 128
    $region45: #{lstm_cell.1} parent=1 // pred_fallthru
      _
    %v89 = vld [vmem:[#allocation2] sm:$0xff]
    %v90 = vld [vmem:[#allocation7] sm:$0xff]
    %v91 = vld [vmem:[#allocation7 + $0x8] sm:$0xff]
    %v92 = vld [vmem:[#allocation5] sm:$0xff]
    %v93 = vld [vmem:[#allocation8] sm:$0xff]
    %v94 = vld [vmem:[#allocation8 + $0x8] sm:$0xff]
    %vm95 = vcmask 130048
    %v97 = vsel %vm95, %v92, 0
    %99 = vmatprep.subr.mxu0 0.0
    %100 = vmatpush1.msra.mxu0 %v93
    %101 = vmatprep.subr.mxu0 0.0
    %102 = vmatpush1.msra.mxu0 %v94
    %103 = vmatprep.subr.mxu0 0.0
    %104 = vmatpush1.msra.mxu0 0.0
    %105 = vmatprep.subr.mxu0 0.0
    %106 = vmatpush1.msra.mxu0 0.0
    %107 = vmatprep.subr.mxu0 0.0
    %108 = vmatpush1.msra.mxu0 0.0
    %109 = vmatprep.subr.mxu0 0.0
    %110 = vmatpush1.msra.mxu0 0.0
    %111 = vmatprep.subr.mxu0 0.0
    %112 = vmatpush1.msra.mxu0 0.0
    %113 = vmatprep.subr.mxu0 0.0
    %114 = vmatpush1.msra.mxu0 0.0
    %115 = vmatprep.subr.mxu0 0.0
    %116 = vmatpush1.msra.mxu0 0.0
    %117 = vmatprep.subr.mxu0 0.0
    %118 = vmatpush1.msra.mxu0 0.0
    %119 = vmatprep.subr.mxu0 0.0
    %120 = vmatpush1.msra.mxu0 0.0
    %121 = vmatprep.subr.mxu0 0.0
    %122 = vmatpush1.msra.mxu0 0.0
    %123 = vmatprep.subr.mxu0 0.0
    %124 = vmatpush1.msra.mxu0 0.0
    %125 = vmatprep.subr.mxu0 0.0
    %126 = vmatpush1.msra.mxu0 0.0
    %127 = vmatprep.subr.mxu0 0.0
    %128 = vmatpush1.msra.mxu0 0.0
    %129 = vmatprep.subr.mxu0 0.0
    %130 = vmatpush1.msra.mxu0 0.0
    %131 = vmatprep.subr.mxu0 0.0
    %132 = vmatpush1.msra.mxu0 0.0
    %133 = vmatprep.subr.mxu0 0.0
    %134 = vmatpush1.msra.mxu0 0.0
    %135 = vmatprep.subr.mxu0 0.0
    %136 = vmatpush1.msra.mxu0 0.0
    %137 = vmatprep.subr.mxu0 0.0
    %138 = vmatpush1.msra.mxu0 0.0
    %139 = vmatprep.subr.mxu0 0.0
    %140 = vmatpush1.msra.mxu0 0.0
    %141 = vmatprep.subr.mxu0 0.0
    %142 = vmatpush1.msra.mxu0 0.0
    %143 = vmatprep.subr.mxu0 0.0
    %144 = vmatpush1.msra.mxu0 0.0
    %145 = vmatprep.subr.mxu0 0.0
    %146 = vmatpush1.msra.mxu0 0.0
    %147 = vmatprep.subr.mxu0 0.0
    %148 = vmatpush1.msra.mxu0 0.0
    %149 = vmatprep.subr.mxu0 0.0
    %150 = vmatpush1.msra.mxu0 0.0
    %151 = vmatprep.subr.mxu0 0.0
    %152 = vmatpush1.msra.mxu0 0.0
    %153 = vmatprep.subr.mxu0 0.0
    %154 = vmatpush1.msra.mxu0 0.0
    %155 = vmatprep.subr.mxu0 0.0
    %156 = vmatpush1.msra.mxu0 0.0
    %157 = vmatprep.subr.mxu0 0.0
    %158 = vmatpush1.msra.mxu0 0.0
    %159 = vmatprep.subr.mxu0 0.0
    %160 = vmatpush1.msra.mxu0 0.0
    %161 = vmatprep.subr.mxu0 0.0
    %162 = vmatpush1.msra.mxu0 0.0
    %163 = vmatprep.mubr.f32.mxu0 0.0
    %164 = vmatmul.mubr.f32.gmra.mrb[0].mxu0 %v97
    %v165 = vpop.f32.mrb[0].mxu0
    %v166 = vadd.f32 0.0, %v165
    %v167 = vpop.f32.mrb[0].mxu0
    %168 = vdwg.mxu0
    %v170 = vsel %vm95, %v89, 0
    %172 = vmatprep.subr.mxu0 0.0
    %173 = vmatpush1.msra.mxu0 %v90
    %174 = vmatprep.subr.mxu0 0.0
    %175 = vmatpush1.msra.mxu0 %v91
    %176 = vmatprep.subr.mxu0 0.0
    %177 = vmatpush1.msra.mxu0 0.0
    %178 = vmatprep.subr.mxu0 0.0
    %179 = vmatpush1.msra.mxu0 0.0
    %180 = vmatprep.subr.mxu0 0.0
    %181 = vmatpush1.msra.mxu0 0.0
    %182 = vmatprep.subr.mxu0 0.0
    %183 = vmatpush1.msra.mxu0 0.0
    %184 = vmatprep.subr.mxu0 0.0
    %185 = vmatpush1.msra.mxu0 0.0
    %186 = vmatprep.subr.mxu0 0.0
    %187 = vmatpush1.msra.mxu0 0.0
    %188 = vmatprep.subr.mxu0 0.0
    %189 = vmatpush1.msra.mxu0 0.0
    %190 = vmatprep.subr.mxu0 0.0
    %191 = vmatpush1.msra.mxu0 0.0
    %192 = vmatprep.subr.mxu0 0.0
    %193 = vmatpush1.msra.mxu0 0.0
    %194 = vmatprep.subr.mxu0 0.0
    %195 = vmatpush1.msra.mxu0 0.0
    %196 = vmatprep.subr.mxu0 0.0
    %197 = vmatpush1.msra.mxu0 0.0
    %198 = vmatprep.subr.mxu0 0.0
    %199 = vmatpush1.msra.mxu0 0.0
    %200 = vmatprep.subr.mxu0 0.0
    %201 = vmatpush1.msra.mxu0 0.0
    %202 = vmatprep.subr.mxu0 0.0
    %203 = vmatpush1.msra.mxu0 0.0
    %204 = vmatprep.subr.mxu0 0.0
    %205 = vmatpush1.msra.mxu0 0.0
    %206 = vmatprep.subr.mxu0 0.0
    %207 = vmatpush1.msra.mxu0 0.0
    %208 = vmatprep.subr.mxu0 0.0
    %209 = vmatpush1.msra.mxu0 0.0
    %210 = vmatprep.subr.mxu0 0.0
    %211 = vmatpush1.msra.mxu0 0.0
    %212 = vmatprep.subr.mxu0 0.0
    %213 = vmatpush1.msra.mxu0 0.0
    %214 = vmatprep.subr.mxu0 0.0
    %215 = vmatpush1.msra.mxu0 0.0
    %216 = vmatprep.subr.mxu0 0.0
    %217 = vmatpush1.msra.mxu0 0.0
    %218 = vmatprep.subr.mxu0 0.0
    %219 = vmatpush1.msra.mxu0 0.0
    %220 = vmatprep.subr.mxu0 0.0
    %221 = vmatpush1.msra.mxu0 0.0
    %222 = vmatprep.subr.mxu0 0.0
    %223 = vmatpush1.msra.mxu0 0.0
    %224 = vmatprep.subr.mxu0 0.0
    %225 = vmatpush1.msra.mxu0 0.0
    %226 = vmatprep.subr.mxu0 0.0
    %227 = vmatpush1.msra.mxu0 0.0
    %228 = vmatprep.subr.mxu0 0.0
    %229 = vmatpush1.msra.mxu0 0.0
    %230 = vmatprep.subr.mxu0 0.0
    %231 = vmatpush1.msra.mxu0 0.0
    %232 = vmatprep.subr.mxu0 0.0
    %233 = vmatpush1.msra.mxu0 0.0
    %234 = vmatprep.subr.mxu0 0.0
    %235 = vmatpush1.msra.mxu0 0.0
    %236 = vmatprep.mubr.f32.mxu0 0.0
    %237 = vmatmul.mubr.f32.gmra.mrb[0].mxu0 %v170
    %v238 = vpop.f32.mrb[0].mxu0
    %v239 = vadd.f32 %v166, %v238
    %v240 = vpop.f32.mrb[0].mxu0
    %241 = vdwg.mxu0
    %v242 = vld [vmem:[%s4] sm:$0x1]
    %v244 = vlaneseq
    %v245 = vshrl.u32 %v244, 7
    %v246 = vsub.s32 0, %v245
    %v247 = vrot.slane %v242, %v246
    %v249 = vadd.f32 %v239, %v247
    %v250 = vxor.u32 %v249, 2147483648
    %v251 = vmul.f32 %v250, 1.442695
    %v252 = vpow.pop %v251
    %v253 = vadd.f32 %v252, 1.0
    %v254 = vrcp.pop %v253
    %v255 = vmul.f32 1.0, %v254
    %v256 = vtanh.pop %v249
    %v257 = vld [vmem:[#allocation10] sm:$0xff]
    %259 = vrot.lane.b32.xlu0 %v257, 32
    %v260 = vpop.permute.xlu0 %259
    %v262 = vmul.f32 %v255, %v260
    %264 = vrot.lane.b32.xlu0 %v256, 64
    %v265 = vpop.permute.xlu0 %264
    %v267 = vmul.f32 %v255, %v265
    %269 = vrot.lane.b32.xlu0 %v267, 32
    %v270 = vpop.permute.xlu0 %269
    %v272 = vadd.f32 %v262, %v270
    %v273 = vtanh.pop %v272
    %275 = vrot.lane.b32.xlu0 %v273, 64
    %v276 = vpop.permute.xlu0 %275
    %v278 = vmul.f32 %v255, %v276
    %280 = vrot.lane.b32.xlu0 %v278, 32
    %v281 = vpop.permute.xlu0 %280
    %vm283 = vcmask 261120
    %284 = vst.msk [vmem:[#allocation11] sm:$0xff] %vm283, %v281
    %286 = vrot.lane.b32.xlu0 %v272, 96
    %v287 = vpop.permute.xlu0 %286
    %289 = vst.msk [vmem:[#allocation12] sm:$0xff] %vm283, %v287
    // Predicated region
    $region46: #{lstm_cell.1} parent=1 // pred_check
      _
    $region47: #{lstm_cell.1} parent=1 // pred_check_branch
      %291 = sbr.rel (0) target = $region49
    $region48: #{lstm_cell.1} parent=1 // pred_region
      %s293 = ssub.s32 128, 128
      %294 = vsyncadd [#allocation4], %s293
      %s296 = sshll.u32 [#allocation11], 4
      %s297 = int_to_ptr.vmem [resolvable:$true] %s296
      %299 = dma.vmem_to_hbm [thread:$0]  %s297, 128, %s6, [#allocation4]
    $region49: #{lstm_cell.1} parent=1 // pred_fallthru
      _
    // Predicated region
    $region50: #{lstm_cell.1} parent=1 // pred_check
      _
    $region51: #{lstm_cell.1} parent=1 // pred_check_branch
      %301 = sbr.rel (0) target = $region53
    $region52: #{lstm_cell.1} parent=1 // pred_region
      %s303 = ssub.s32 128, 128
      %304 = vsyncadd [#allocation13], %s303
      %s306 = sshll.u32 [#allocation12], 4
      %s307 = int_to_ptr.vmem [resolvable:$true] %s306
      %309 = dma.vmem_to_hbm [thread:$0]  %s307, 128, %s7, [#allocation13]
    $region53: #{lstm_cell.1} parent=1 // pred_fallthru
      _
    // Predicated region
    $region54: #{lstm_cell.1} parent=1 // pred_check
      _
    $region55: #{lstm_cell.1} parent=1 // pred_check_branch
      %311 = sbr.rel (0) target = $region57
    $region56: #{lstm_cell.1} parent=1 // pred_region
      %312 = dma.done [#allocation4], 128
    $region57: #{lstm_cell.1} parent=1 // pred_fallthru
      _
    // Predicated region
    $region58: #{lstm_cell.1} parent=1 // pred_check
      _
    $region59: #{lstm_cell.1} parent=1 // pred_check_branch
      %314 = sbr.rel (0) target = $region61
    $region60: #{lstm_cell.1} parent=1 // pred_region
      %315 = dma.done [#allocation13], 128
    $region61: #{lstm_cell.1} parent=1 // pred_fallthru
      _
    %316 = vsyncpa [#allocation3], 1
    %317 = vsyncpa [#allocation6], 1
    %318 = vsyncpa [#allocation9], 1
    %319 = vsyncpa [#allocation4], 1
    %320 = vsyncpa [#allocation13], 1

</llo_original>
